<compile_context>
chip_gen: v5e
topology: v5e:2x2
jax: 0.10.0
libtpu: 0.0.40
codegen_flags: <defaults>
</compile_context>

<pallas_src>
import functools

import jax
import jax.numpy as jnp
from jax import lax
from jax.experimental import pallas as pl
from jax.experimental.pallas import tpu as pltpu

_LANES = 128


def _composite_loss_kernel(p_ref, t_ref, o_ref, *,
                           w_sq, w_ad, w_huber,
                           bm, chunk_rows, acc_rows,
                           rows, steps, need_row_mask, low_precision_diff):
    c = pl.program_id(0)   # part (TensorCore) axis
    i = pl.program_id(1)   # reduction axis within this part

    @pl.when(i == 0)
    def _():
        o_ref[...] = jnp.zeros_like(o_ref)

    num_chunks = bm // chunk_rows
    # Valid data rows remaining at the start of this block (can be <= 0 for
    # fully-overshooting blocks when num_parts * steps * bm > rows).
    rows_valid = rows - (c * steps + i) * bm

    def contrib_of(p, t):
        if low_precision_diff and p.dtype != jnp.float32:
            d = (p - t).astype(jnp.float32)
        else:
            d = p.astype(jnp.float32) - t.astype(jnp.float32)
        ad = jnp.abs(d)
        sq = d * d
        r = jnp.maximum(ad - 1.0, 0.0)            # select-free SmoothL1 tail
        # Weighted {MSE, L1, SmoothL1} per element with weights and 1/N folded:
        #   huber = 0.5*sq - 0.5*relu(|d|-1)^2
        return w_sq * sq + w_ad * ad - w_huber * (r * r)

    def fold(x):
        # (chunk_rows, 128) -> (acc_rows, 128) with pure VPU adds; the reshape
        # only splits the sublane dim at a multiple of 8, so it is layout-free.
        return jnp.sum(x.reshape(chunk_rows // acc_rows, acc_rows, _LANES),
                       axis=0)

    def one_chunk(r0, masked):
        p = p_ref[pl.ds(r0, chunk_rows), :]
        t = t_ref[pl.ds(r0, chunk_rows), :]
        contrib = contrib_of(p, t)
        if masked:
            row_ids = lax.broadcasted_iota(jnp.int32, (chunk_rows, _LANES), 0)
            # Select (not multiply): OOB rows can hold garbage / NaN.
            contrib = jnp.where(row_ids < rows_valid - r0, contrib, 0.0)
        o_ref[...] += fold(contrib)

    def accumulate(masked):
        if num_chunks == 1:
            one_chunk(0, masked)
        else:
            def body(ci, carry):
                one_chunk(pl.multiple_of(ci * chunk_rows, chunk_rows), masked)
                return carry
            lax.fori_loop(0, num_chunks, body, 0)

    if need_row_mask:
        # Only the ragged / overshoot blocks pay the masking cost.
        @pl.when(rows_valid >= bm)
        def _():
            accumulate(False)

        @pl.when(rows_valid < bm)
        def _():
            accumulate(True)
    else:
        accumulate(False)


def composite_loss(pred, target, weights=(1.0, 0.5, 0.5), *,
                   block_rows=8192, num_parts=1, low_precision_diff=False):
    """Weighted average of {MSE, L1, SmoothL1} losses, computed in Pallas.

    num_parts=1 for single-TensorCore chips (v5e/v6e); on v7x pass
    num_parts=2 to shard the row range across both TensorCores.
    """
    assert pred.shape == target.shape
    total_w = float(sum(weights))
    w_mse, w_l1, w_sl1 = (float(w) / total_w for w in weights)

    n_elems = 1
    for s in pred.shape:
        n_elems *= s
    inv_n = 1.0 / float(n_elems)

    # Per-element coefficients with the loss weights and 1/N folded in.
    w_sq = (w_mse + 0.5 * w_sl1) * inv_n
    w_ad = w_l1 * inv_n
    w_huber = 0.5 * w_sl1 * inv_n

    itemsize = jnp.dtype(pred.dtype).itemsize
    sub_mult = max(8, 32 // max(1, itemsize))   # 8 f32, 16 bf16, 32 int8/fp8

    # Lane-dense slab: (rows, 128).  The reshape of a contiguous array is a
    # free bitcast; padding (a real copy) only happens when n % 128 != 0.
    flat_p = pred.reshape(-1)
    flat_t = target.reshape(-1)
    lane_pad = (-n_elems) % _LANES
    if lane_pad:
        # TODO(synk): this still copies the inputs for n % 128 != 0 callers;
        # zero padding is loss-neutral (d=0 -> contrib=0), 1/N uses true count.
        flat_p = jnp.pad(flat_p, (0, lane_pad))
        flat_t = jnp.pad(flat_t, (0, lane_pad))
    rows = (n_elems + lane_pad) // _LANES
    p2d = flat_p.reshape(rows, _LANES)
    t2d = flat_t.reshape(rows, _LANES)

    # Row-block size: a multiple of 512 at large sizes so the in-kernel chunk
    # loop divides evenly; a multiple of the dtype sublane tile at small sizes.
    # Ragged tails / overshoot are handled by in-kernel masking (no row pad).
    if rows >= 512:
        bm_cap = max(512, (block_rows // 512) * 512)
        bm = min(bm_cap, ((rows + 511) // 512) * 512)
        chunk_rows = 512
        acc_rows = 32
    else:
        bm = ((rows + sub_mult - 1) // sub_mult) * sub_mult
        chunk_rows = bm
        acc_rows = next(a for a in (32, 16, 8) if bm % a == 0)

    steps_total = -(-rows // bm)
    num_parts = max(1, min(int(num_parts), steps_total))
    steps = -(-steps_total // num_parts)
    need_row_mask = (num_parts * steps * bm != rows)

    # Double-buffered inputs plus headroom; never below the default scoped
    # limit, capped for v7x's 64 MiB physical VMEM.
    in_block_bytes = bm * _LANES * itemsize
    vmem_limit = int(min(48 * 2**20,
                         max(32 * 2**20, 4 * in_block_bytes + 8 * 2**20)))

    kernel = functools.partial(
        _composite_loss_kernel,
        w_sq=w_sq, w_ad=w_ad, w_huber=w_huber,
        bm=bm, chunk_rows=chunk_rows, acc_rows=acc_rows,
        rows=rows, steps=steps, need_row_mask=need_row_mask,
        low_precision_diff=low_precision_diff)

    def in_index(c, i):
        # Clamp so overshoot steps re-read the last valid block (their
        # contribution is masked to zero in the kernel).
        return (jnp.minimum(c * steps + i, steps_total - 1), 0)

    if num_parts > 1:
        dim_sem = (pltpu.CORE_PARALLEL, pltpu.ARBITRARY)   # v7x dual-TC split
    else:
        dim_sem = ("parallel", "arbitrary")

    out = pl.pallas_call(
        kernel,
        out_shape=jax.ShapeDtypeStruct((num_parts, acc_rows, _LANES),
                                       jnp.float32),
        grid_spec=pltpu.PrefetchScalarGridSpec(
            num_scalar_prefetch=0,
            grid=(num_parts, steps),
            in_specs=[
                pl.BlockSpec((bm, _LANES), in_index),
                pl.BlockSpec((bm, _LANES), in_index),
            ],
            # Output block is resident across the reduction axis and doubles
            # as the accumulator (no VMEM scratch).
            out_specs=pl.BlockSpec((None, acc_rows, _LANES),
                                   lambda c, i: (c, 0, 0)),
        ),
        compiler_params=pltpu.CompilerParams(
            dimension_semantics=dim_sem,
            vmem_limit_bytes=vmem_limit,
        ),
    )(p2d, t2d)

    # Tiny final reduction over the per-part (acc_rows, 128) partial sums.
    return jnp.sum(out)


def _reference(pred, target, weights=(1.0, 0.5, 0.5)):
    total_w = float(sum(weights))
    w = [float(x) / total_w for x in weights]
    d = pred.astype(jnp.float32) - target.astype(jnp.float32)
    ad = jnp.abs(d)
    mse = jnp.mean(d * d)
    l1 = jnp.mean(ad)
    sl1 = jnp.mean(jnp.where(ad < 1.0, 0.5 * d * d, ad - 0.5))
    return w[0] * mse + w[1] * l1 + w[2] * sl1


if __name__ == "__main__":
    key = jax.random.PRNGKey(0)
    kp, kt = jax.random.split(key)
    # NCHW, matching the PyTorch convention for the wrapped loss inputs.
    pred = jax.random.normal(kp, (2, 4, 16, 16), dtype=jnp.float32)
    target = jax.random.normal(kt, (2, 4, 16, 16), dtype=jnp.float32)

    loss = composite_loss(pred, target)
    loss = jax.block_until_ready(loss)

    ref = _reference(pred, target)
    assert jnp.allclose(loss, ref, rtol=1e-5, atol=1e-5), (loss, ref)

    print("KERNEL_OK")
</pallas_src>

<mosaic_0001>
module attributes {stable_mosaic.version = 11 : i64} {
  func.func @_composite_loss_kernel(%arg0: i32, %arg1: i32, %arg2: memref<16x128xf32, #tpu.memory_space<vmem>>, %arg3: memref<16x128xf32, #tpu.memory_space<vmem>>, %arg4: memref<1x16x128xf32, #tpu.memory_space<vmem>>) attributes {dimension_semantics = [#tpu.dimension_semantics<parallel>, #tpu.dimension_semantics<arbitrary>], iteration_bounds = array<i64: 1, 1>, scalar_prefetch = 0 : i64, scratch_operands = 0 : i64, tpu.core_type = #tpu.core_type<tc>, window_params = [{transform_indices = @transform_0, window_bounds = array<i64: 16, 128>}, {transform_indices = @transform_1, window_bounds = array<i64: 16, 128>}, {transform_indices = @transform_2, window_bounds = array<i64: 1, 16, 128>}]} {
    %c0_i32 = arith.constant 0 : i32
    %0 = arith.cmpi eq, %arg1, %c0_i32 : i32
    %1 = arith.extui %0 : i1 to i32
    %c0_i32_0 = arith.constant 0 : i32
    %2 = arith.cmpi ne, %1, %c0_i32_0 : i32
    scf.if %2 {
      %cst_15 = arith.constant 0.000000e+00 : f32
      %29 = vector.broadcast %cst_15 : f32 to vector<16x128xf32>
      %c0_16 = arith.constant 0 : index
      %c0_17 = arith.constant 0 : index
      %c0_18 = arith.constant 0 : index
      %30 = vector.load %arg4[%c0_16, %c0_17, %c0_18] : memref<1x16x128xf32, #tpu.memory_space<vmem>>, vector<1x16x128xf32>
      %31 = vector.shape_cast %30 : vector<1x16x128xf32> to vector<16x128xf32>
      %32 = vector.shape_cast %29 : vector<16x128xf32> to vector<1x16x128xf32>
      tpu.vector_store %arg4[%c0_16, %c0_17, %c0_18], %32 {strides = array<i32>} : memref<1x16x128xf32, #tpu.memory_space<vmem>>, vector<1x16x128xf32>,
    } else {
    }
    %c0 = arith.constant 0 : index
    %c0_1 = arith.constant 0 : index
    %3 = vector.load %arg2[%c0, %c0_1] : memref<16x128xf32, #tpu.memory_space<vmem>>, vector<16x128xf32>
    %c0_2 = arith.constant 0 : index
    %c0_3 = arith.constant 0 : index
    %4 = vector.load %arg3[%c0_2, %c0_3] : memref<16x128xf32, #tpu.memory_space<vmem>>, vector<16x128xf32>
    %5 = arith.subf %3, %4 : vector<16x128xf32>
    %6 = math.absf %5 : vector<16x128xf32>
    %7 = arith.mulf %5, %5 : vector<16x128xf32>
    %cst = arith.constant 1.000000e+00 : f32
    %8 = vector.broadcast %cst : f32 to vector<16x128xf32>
    %9 = arith.subf %6, %8 : vector<16x128xf32>
    %cst_4 = arith.constant 0.000000e+00 : f32
    %10 = vector.broadcast %cst_4 : f32 to vector<16x128xf32>
    %11 = arith.maximumf %9, %10 : vector<16x128xf32>
    %cst_5 = arith.constant 3.05175781E-4 : f32
    %12 = vector.broadcast %cst_5 : f32 to vector<16x128xf32>
    %13 = arith.mulf %12, %7 : vector<16x128xf32>
    %cst_6 = arith.constant 1.22070313E-4 : f32
    %14 = vector.broadcast %cst_6 : f32 to vector<16x128xf32>
    %15 = arith.mulf %14, %6 : vector<16x128xf32>
    %16 = arith.addf %13, %15 : vector<16x128xf32>
    %17 = arith.mulf %11, %11 : vector<16x128xf32>
    %cst_7 = arith.constant 6.10351563E-5 : f32
    %18 = vector.broadcast %cst_7 : f32 to vector<16x128xf32>
    %19 = arith.mulf %18, %17 : vector<16x128xf32>
    %20 = arith.subf %16, %19 : vector<16x128xf32>
    %c0_8 = arith.constant 0 : index
    %c0_9 = arith.constant 0 : index
    %c0_10 = arith.constant 0 : index
    %21 = vector.load %arg4[%c0_8, %c0_9, %c0_10] : memref<1x16x128xf32, #tpu.memory_space<vmem>>, vector<1x16x128xf32>
    %22 = vector.shape_cast %21 : vector<1x16x128xf32> to vector<16x128xf32>
    %23 = vector.shape_cast %20 : vector<16x128xf32> to vector<1x16x128xf32>
    %cst_11 = arith.constant dense<0.000000e+00> : vector<16x128xf32>
    %24 = vector.multi_reduction <add>, %23, %cst_11 [0] : vector<1x16x128xf32> to vector<16x128xf32>
    %25 = arith.addf %22, %24 : vector<16x128xf32>
    %c0_12 = arith.constant 0 : index
    %c0_13 = arith.constant 0 : index
    %c0_14 = arith.constant 0 : index
    %26 = vector.load %arg4[%c0_12, %c0_13, %c0_14] : memref<1x16x128xf32, #tpu.memory_space<vmem>>, vector<1x16x128xf32>
    %27 = vector.shape_cast %26 : vector<1x16x128xf32> to vector<16x128xf32>
    %28 = vector.shape_cast %25 : vector<16x128xf32> to vector<1x16x128xf32>
    tpu.vector_store %arg4[%c0_12, %c0_13, %c0_14], %28 {strides = array<i32>} : memref<1x16x128xf32, #tpu.memory_space<vmem>>, vector<1x16x128xf32>,
    return
  }
  func.func @transform_0(%arg0: i32, %arg1: i32) -> (i32, i32) {
    %c1_i32 = arith.constant 1 : i32
    %0 = arith.muli %arg0, %c1_i32 : i32
    %1 = arith.addi %0, %arg1 : i32
    %c0_i32 = arith.constant 0 : i32
    %2 = arith.minsi %1, %c0_i32 : i32
    %c0_i32_0 = arith.constant 0 : i32
    %c0_i32_1 = arith.constant 0 : i32
    return %2, %c0_i32_0 : i32, i32
  }
  func.func @transform_1(%arg0: i32, %arg1: i32) -> (i32, i32) {
    %c1_i32 = arith.constant 1 : i32
    %0 = arith.muli %arg0, %c1_i32 : i32
    %1 = arith.addi %0, %arg1 : i32
    %c0_i32 = arith.constant 0 : i32
    %2 = arith.minsi %1, %c0_i32 : i32
    %c0_i32_0 = arith.constant 0 : i32
    %c0_i32_1 = arith.constant 0 : i32
    return %2, %c0_i32_0 : i32, i32
  }
  func.func @transform_2(%arg0: i32, %arg1: i32) -> (i32, i32, i32) {
    %c0_i32 = arith.constant 0 : i32
    %c0_i32_0 = arith.constant 0 : i32
    %c0_i32_1 = arith.constant 0 : i32
    return %arg0, %c0_i32, %c0_i32_0 : i32, i32, i32
  }
}

</mosaic_0001>

<llo_original>
// kernel: tpu_custom_call.1
$region0: #{tpu_custom_call.1}
  #allocation0 [shape = 'u32[]', space=smem, size = 0x4, offset = 0x4, fixed_abs, tag = 'smem constant byte address 0x4 - core index']
  #allocation1 [shape = 'u32[72,128]{1,0:T(1,128)}', space=vmem, size = 0x9000, scoped, tag = 'internal scratch']
  %s0 = inlined_call_operand.hbm [shape: f32[16,128], index: 0, kind: input, shape index: {}]
  %s1 = inlined_call_operand.hbm [shape: f32[16,128], index: 1, kind: input, shape index: {}]
  %s2 = inlined_call_operand.hbm [shape: f32[1,16,128], index: 2, kind: output, shape index: {}]
  %s3 = sld [smem:[#allocation0]]
  $region30: #{tpu_custom_call.1} parent=0
    _
  %s5 = ssub.s32 1, %s3
  %s6 = scalar_select 0, %s5, %s3
  $region1: #{tpu_custom_call.1} parent=0
    #allocation2 [shape = 'u8[8192]{0}', space=vmem, size = 0x2000, scoped, tag = 'input window, operand 0, single buffered']
    #allocation3 [shape = 's32[1]{0}', space=sflag, size = 0x4, scoped, tag = 'scoped memory for tpu_custom_call.1']
    #allocation4 [shape = 's32[1]{0}', space=sflag, size = 0x4, scoped, tag = 'scoped memory for tpu_custom_call.1']
    #allocation5 [shape = 'u8[8192]{0}', space=vmem, size = 0x2000, scoped, tag = 'input window, operand 1, single buffered']
    #allocation6 [shape = 's32[1]{0}', space=sflag, size = 0x4, scoped, tag = 'scoped memory for tpu_custom_call.1']
    #allocation7 [shape = 'u8[8192]{0}', space=vmem, size = 0x2000, scoped, tag = 'output window, operand 0, single buffered']
    %7 = vsyncpa [#allocation3], 0
    %8 = vsyncpa [#allocation6], 0
    %9 = vsyncpa [#allocation4], 0
    // Predicated region
    $region2: #{tpu_custom_call.1} parent=1 // pred_check
      _
    $region3: #{tpu_custom_call.1} parent=1 // pred_check_branch
      %11 = sbr.rel (0) target = $region5
    $region4: #{tpu_custom_call.1} parent=1 // pred_region
      %s12 = sadd.s32 0, 0
      %p13 = scmp.lt.s32.totalorder %s12, 0
      %s14 = scalar_select %p13, %s12, 0
      %s15 = smul.u32 2, %s14
      %17 = vsyncadd [#allocation3], 0
      %s18 = smul.addr %s15, 8
      %s19 = scalar_lea.hbm %s0, %s18
      %s20 = sshll.u32 %s19, 4
      %s21 = int_to_ptr.hbm [resolvable:$true] %s20
      %s22 = sshll.u32 [#allocation2], 4
      %s23 = int_to_ptr.vmem [resolvable:$true] %s22
      %28 = dma.hbm_to_vmem [thread:$0]  %s21, 256, %s23, [#allocation3], 128, 128, 8
    $region5: #{tpu_custom_call.1} parent=1 // pred_fallthru
      _
    // Predicated region
    $region6: #{tpu_custom_call.1} parent=1 // pred_check
      _
    $region7: #{tpu_custom_call.1} parent=1 // pred_check_branch
      %30 = sbr.rel (0) target = $region9
    $region8: #{tpu_custom_call.1} parent=1 // pred_region
      %s31 = sadd.s32 0, 0
      %p32 = scmp.lt.s32.totalorder %s31, 0
      %s33 = scalar_select %p32, %s31, 0
      %s34 = smul.u32 2, %s33
      %36 = vsyncadd [#allocation6], 0
      %s37 = smul.addr %s34, 8
      %s38 = scalar_lea.hbm %s1, %s37
      %s39 = sshll.u32 %s38, 4
      %s40 = int_to_ptr.hbm [resolvable:$true] %s39
      %s41 = sshll.u32 [#allocation5], 4
      %s42 = int_to_ptr.vmem [resolvable:$true] %s41
      %47 = dma.hbm_to_vmem [thread:$0]  %s40, 256, %s42, [#allocation6], 128, 128, 8
    $region9: #{tpu_custom_call.1} parent=1 // pred_fallthru
      _
    // Predicated region
    $region10: #{tpu_custom_call.1} parent=1 // pred_check
      _
    $region11: #{tpu_custom_call.1} parent=1 // pred_check_branch
      %49 = sbr.rel (0) target = $region13
    $region12: #{tpu_custom_call.1} parent=1 // pred_region
      %51 = dma.done [#allocation3], 256
    $region13: #{tpu_custom_call.1} parent=1 // pred_fallthru
      _
    // Predicated region
    $region14: #{tpu_custom_call.1} parent=1 // pred_check
      _
    $region15: #{tpu_custom_call.1} parent=1 // pred_check_branch
      %53 = sbr.rel (0) target = $region17
    $region16: #{tpu_custom_call.1} parent=1 // pred_region
      %55 = dma.done [#allocation6], 256
    $region17: #{tpu_custom_call.1} parent=1 // pred_fallthru
      _
    %s56 = sadd.s32 0, 0
    %p57 = scmp.lt.s32.totalorder %s56, 0
    %s58 = scalar_select %p57, %s56, 0
    %s59 = smul.u32 2, %s58
    %s60 = sadd.s32 0, 0
    %p61 = scmp.lt.s32.totalorder %s60, 0
    %s62 = scalar_select %p61, %s60, 0
    %s63 = smul.u32 2, %s62
    %p64 = scmp.eq.s32.totalorder 0, 0
    // Predicated region
    $region18: #{tpu_custom_call.1} parent=1 // pred_check
      %p65 = pneg %p64
    $region19: #{tpu_custom_call.1} parent=1 // pred_check_branch
      %67 = sbr.rel (%p65) target = $region21
    $region20: #{tpu_custom_call.1} parent=1 // pred_region
      %68 = vst [vmem:[#allocation7] sm:$0xff] 0.0
      %69 = vst [vmem:[#allocation7 + $0x8] sm:$0xff] 0.0
    $region21: #{tpu_custom_call.1} parent=1 // pred_fallthru
      _
    %v70 = vld [vmem:[#allocation2] sm:$0xff]
    %v71 = vld [vmem:[#allocation2 + $0x8] sm:$0xff]
    %v72 = vld [vmem:[#allocation5] sm:$0xff]
    %v73 = vld [vmem:[#allocation5 + $0x8] sm:$0xff]
    %v74 = vsub.f32 %v70, %v72
    %v75 = vsub.f32 %v71, %v73
    %v76 = vand.u32 2147483647, %v74
    %v77 = vand.u32 2147483647, %v75
    %v78 = vmul.f32 %v74, %v74
    %v79 = vmul.f32 %v75, %v75
    %v80 = vsub.f32 %v76, 1.0
    %v81 = vsub.f32 %v77, 1.0
    %v82 = vmax.f32 %v80, 0.0
    %v83 = vmax.f32 %v81, 0.0
    %v84 = vmul.f32 %v78, 0.00030517578
    %v85 = vmul.f32 %v79, 0.00030517578
    %v86 = vmul.f32 %v76, 0.00012207031
    %v87 = vmul.f32 %v77, 0.00012207031
    %v88 = vadd.f32 %v84, %v86
    %v89 = vadd.f32 %v85, %v87
    %v90 = vmul.f32 %v82, %v82
    %v91 = vmul.f32 %v83, %v83
    %v92 = vmul.f32 %v90, 6.1035156e-05
    %v93 = vmul.f32 %v91, 6.1035156e-05
    %v94 = vsub.f32 %v88, %v92
    %v95 = vsub.f32 %v89, %v93
    %v96 = vld [vmem:[#allocation7] sm:$0xff]
    %v97 = vld [vmem:[#allocation7 + $0x8] sm:$0xff]
    %v98 = vadd.f32 %v94, 0.0
    %v99 = vadd.f32 %v95, 0.0
    %v100 = vadd.f32 %v96, %v98
    %v101 = vadd.f32 %v97, %v99
    %102 = vst [vmem:[#allocation7] sm:$0xff] %v100
    %103 = vst [vmem:[#allocation7 + $0x8] sm:$0xff] %v101
    // Predicated region
    $region22: #{tpu_custom_call.1} parent=1 // pred_check
      _
    $region23: #{tpu_custom_call.1} parent=1 // pred_check_branch
      %105 = sbr.rel (0) target = $region25
    $region24: #{tpu_custom_call.1} parent=1 // pred_region
      %107 = vsyncadd [#allocation4], 0
      %s108 = sshll.u32 [#allocation7], 4
      %s109 = int_to_ptr.vmem [resolvable:$true] %s108
      %s110 = sshll.u32 %s2, 4
      %s111 = int_to_ptr.hbm [resolvable:$true] %s110
      %116 = dma.vmem_to_hbm [thread:$0]  %s109, 256, %s111, [#allocation4], 128, 128, 8
    $region25: #{tpu_custom_call.1} parent=1 // pred_fallthru
      _
    // Predicated region
    $region26: #{tpu_custom_call.1} parent=1 // pred_check
      _
    $region27: #{tpu_custom_call.1} parent=1 // pred_check_branch
      %118 = sbr.rel (0) target = $region29
    $region28: #{tpu_custom_call.1} parent=1 // pred_region
      %120 = dma.done [#allocation4], 256
    $region29: #{tpu_custom_call.1} parent=1 // pred_fallthru
      _
    %121 = vsyncpa [#allocation3], 1
    %122 = vsyncpa [#allocation6], 1
    %123 = vsyncpa [#allocation4], 1

</llo_original>
